<compile_context>
chip_gen: v7x
topology: tpu7x:2x2x1
jax: 0.10.0
libtpu: 0.0.40
codegen_flags: <defaults>
</compile_context>

<pallas_src>
import functools

import jax
import jax.numpy as jnp
from jax import lax
from jax.experimental import pallas as pl
from jax.experimental.pallas import tpu as pltpu


def _embedding_gather_kernel(ids_smem, table_hbm, out_ref, dma_sems, *,
                             token_tile, num_inflight):
    """Gather `token_tile` rows of the HBM table into the VMEM output block."""
    base = pl.program_id(0) * token_tile

    def start_row(r, slot):
        row = ids_smem[base + r]
        pltpu.make_async_copy(
            table_hbm.at[pl.ds(row, 1), :],
            out_ref.at[pl.ds(r, 1), :],
            dma_sems.at[slot],
        ).start()

    def wait_row(r, slot):
        # Only the transfer shape / semaphore matter for wait(); use a fixed
        # source row so we don't re-read SMEM after the DMA.
        pltpu.make_async_copy(
            table_hbm.at[pl.ds(0, 1), :],
            out_ref.at[pl.ds(r, 1), :],
            dma_sems.at[slot],
        ).wait()

    # Prime the pipeline with up to `num_inflight` outstanding row copies.
    n_prime = min(num_inflight, token_tile)
    for s in range(n_prime):  # static unroll; num_inflight is small
        start_row(s, s)

    def body(r, carry):
        slot = r % num_inflight
        wait_row(r, slot)
        nxt = r + num_inflight

        @pl.when(nxt < token_tile)
        def _():
            start_row(nxt, slot)

        return carry

    lax.fori_loop(0, token_tile, body, 0)


def word_embedding_forward(token_ids, embedding_table, *,
                           token_tile=128, num_inflight=8):
    """Pallas equivalent of WordEmbedding.forward (self.embedding(inputs)).

    token_ids       : (B, S) integer token ids
    embedding_table : (V, E) embedding weights (row `padding_idx` zeroed)
    returns         : (B, S, E) gathered embeddings
    """
    B, S = token_ids.shape
    V, E = embedding_table.shape
    N = B * S

    def _round_up(x, m):
        return ((x + m - 1) // m) * m

    # Don't use a tile larger than the (sublane-padded) token count.
    token_tile = min(token_tile, _round_up(N, 8))
    n_tiles = (N + token_tile - 1) // token_tile
    n_pad = n_tiles * token_tile

    flat_ids = token_ids.reshape(N).astype(jnp.int32)
    # Defensive clamp: avoids an out-of-bounds DMA for bad ids.
    # TODO(synk): torch.nn.Embedding raises on out-of-range ids; here they are clamped.
    flat_ids = jnp.clip(flat_ids, 0, V - 1)
    if n_pad != N:
        # Padded slots gather row 0 (harmless) and are sliced off below.
        flat_ids = jnp.pad(flat_ids, (0, n_pad - N))

    kernel = functools.partial(
        _embedding_gather_kernel,
        token_tile=token_tile,
        num_inflight=num_inflight,
    )

    out = pl.pallas_call(
        kernel,
        out_shape=jax.ShapeDtypeStruct((n_pad, E), embedding_table.dtype),
        grid_spec=pltpu.PrefetchScalarGridSpec(
            num_scalar_prefetch=1,                    # flat_ids -> SMEM
            grid=(n_tiles,),
            in_specs=[
                pl.BlockSpec(memory_space=pl.ANY),    # table stays in HBM
            ],
            out_specs=pl.BlockSpec((token_tile, E), lambda i, ids: (i, 0)),
            scratch_shapes=[pltpu.SemaphoreType.DMA((num_inflight,))],
        ),
        compiler_params=pltpu.CompilerParams(
            dimension_semantics=("arbitrary",)),
    )(flat_ids, embedding_table)

    return out[:N].reshape(B, S, E)


def init_embedding_table(key, vocab_size, embedding_dim, padding_idx=0):
    # nn.Embedding default init: N(0, 1), with the padding_idx row zeroed.
    w = jax.random.normal(key, (vocab_size, embedding_dim), dtype=jnp.float32)
    w = w.at[padding_idx].set(0.0)
    return w


if __name__ == "__main__":
    key = jax.random.PRNGKey(0)
    k_w, k_ids = jax.random.split(key)

    vocab_size = 1024
    embedding_dim = 128        # lane-dense output (multiple of 128)
    batch = 2
    seq = 8
    padding_idx = 0

    emb_table = init_embedding_table(k_w, vocab_size, embedding_dim,
                                     padding_idx=padding_idx)
    token_ids = jax.random.randint(k_ids, (batch, seq), 0, vocab_size,
                                   dtype=jnp.int32)
    # Make sure at least one padding token appears (exercises the zero row).
    token_ids = token_ids.at[0, 0].set(padding_idx)

    out = word_embedding_forward(token_ids, emb_table)
    out = jax.block_until_ready(out)

    # Reference check: plain JAX gather (matches torch.nn.Embedding forward).
    ref = jnp.take(emb_table, token_ids, axis=0)
    assert out.shape == (batch, seq, embedding_dim)
    assert jnp.array_equal(out, ref), "mismatch vs reference gather"

    print("KERNEL_OK")
</pallas_src>

<mosaic_0001>
module attributes {stable_mosaic.version = 11 : i64} {
  func.func @_embedding_gather_kernel(%arg0: i32, %arg1: memref<16xi32, #tpu.memory_space<smem>>, %arg2: memref<1024x128xf32, #tpu.memory_space<any>>, %arg3: memref<16x128xf32, #tpu.memory_space<vmem>>, %arg4: memref<8x!tpu.dma_semaphore, #tpu.memory_space<semaphore_mem>>) attributes {dimension_semantics = [#tpu.dimension_semantics<arbitrary>], iteration_bounds = array<i64: 1>, scalar_prefetch = 1 : i64, scratch_operands = 1 : i64, tpu.core_type = #tpu.core_type<tc>, window_params = [{}, {transform_indices = @transform_1, window_bounds = array<i64: 16, 128>}]} {
    %c16_i32 = arith.constant 16 : i32
    %0 = arith.muli %arg0, %c16_i32 : i32
    %c0_i32 = arith.constant 0 : i32
    %1 = arith.addi %0, %c0_i32 : i32
    %2 = arith.index_cast %1 : i32 to index
    %3 = memref.load %arg1[%2] : memref<16xi32, #tpu.memory_space<smem>>
    %c0_i32_0 = arith.constant 0 : i32
    %c0_i32_1 = arith.constant 0 : i32
    %4 = tpu.memref_slice %arg2[%3, %c0_i32_1] : memref<1024x128xf32, #tpu.memory_space<any>> -> memref<1x128xf32, #tpu.memory_space<any>>
    %c0_i32_2 = arith.constant 0 : i32
    %c0_i32_3 = arith.constant 0 : i32
    %5 = tpu.memref_slice %arg3[%c0_i32_2, %c0_i32_3] : memref<16x128xf32, #tpu.memory_space<vmem>> -> memref<1x128xf32, #tpu.memory_space<vmem>>
    %6 = tpu.memref_slice %arg4[%c0_i32_0] : memref<8x!tpu.dma_semaphore, #tpu.memory_space<semaphore_mem>> -> memref<1x!tpu.dma_semaphore, #tpu.memory_space<semaphore_mem>>
    %7 = tpu.memref_squeeze %6 : memref<1x!tpu.dma_semaphore, #tpu.memory_space<semaphore_mem>> -> memref<!tpu.dma_semaphore, #tpu.memory_space<semaphore_mem>>
    tpu.enqueue_dma source(%4 : memref<1x128xf32, #tpu.memory_space<any>>) target(%5 : memref<1x128xf32, #tpu.memory_space<vmem>>) target_semaphore(%7 : memref<!tpu.dma_semaphore, #tpu.memory_space<semaphore_mem>>)
    %c1_i32 = arith.constant 1 : i32
    %8 = arith.addi %0, %c1_i32 : i32
    %9 = arith.index_cast %8 : i32 to index
    %10 = memref.load %arg1[%9] : memref<16xi32, #tpu.memory_space<smem>>
    %c1_i32_4 = arith.constant 1 : i32
    %c0_i32_5 = arith.constant 0 : i32
    %11 = tpu.memref_slice %arg2[%10, %c0_i32_5] : memref<1024x128xf32, #tpu.memory_space<any>> -> memref<1x128xf32, #tpu.memory_space<any>>
    %c1_i32_6 = arith.constant 1 : i32
    %c0_i32_7 = arith.constant 0 : i32
    %12 = tpu.memref_slice %arg3[%c1_i32_6, %c0_i32_7] : memref<16x128xf32, #tpu.memory_space<vmem>> -> memref<1x128xf32, #tpu.memory_space<vmem>>
    %13 = tpu.memref_slice %arg4[%c1_i32_4] : memref<8x!tpu.dma_semaphore, #tpu.memory_space<semaphore_mem>> -> memref<1x!tpu.dma_semaphore, #tpu.memory_space<semaphore_mem>>
    %14 = tpu.memref_squeeze %13 : memref<1x!tpu.dma_semaphore, #tpu.memory_space<semaphore_mem>> -> memref<!tpu.dma_semaphore, #tpu.memory_space<semaphore_mem>>
    tpu.enqueue_dma source(%11 : memref<1x128xf32, #tpu.memory_space<any>>) target(%12 : memref<1x128xf32, #tpu.memory_space<vmem>>) target_semaphore(%14 : memref<!tpu.dma_semaphore, #tpu.memory_space<semaphore_mem>>)
    %c2_i32 = arith.constant 2 : i32
    %15 = arith.addi %0, %c2_i32 : i32
    %16 = arith.index_cast %15 : i32 to index
    %17 = memref.load %arg1[%16] : memref<16xi32, #tpu.memory_space<smem>>
    %c2_i32_8 = arith.constant 2 : i32
    %c0_i32_9 = arith.constant 0 : i32
    %18 = tpu.memref_slice %arg2[%17, %c0_i32_9] : memref<1024x128xf32, #tpu.memory_space<any>> -> memref<1x128xf32, #tpu.memory_space<any>>
    %c2_i32_10 = arith.constant 2 : i32
    %c0_i32_11 = arith.constant 0 : i32
    %19 = tpu.memref_slice %arg3[%c2_i32_10, %c0_i32_11] : memref<16x128xf32, #tpu.memory_space<vmem>> -> memref<1x128xf32, #tpu.memory_space<vmem>>
    %20 = tpu.memref_slice %arg4[%c2_i32_8] : memref<8x!tpu.dma_semaphore, #tpu.memory_space<semaphore_mem>> -> memref<1x!tpu.dma_semaphore, #tpu.memory_space<semaphore_mem>>
    %21 = tpu.memref_squeeze %20 : memref<1x!tpu.dma_semaphore, #tpu.memory_space<semaphore_mem>> -> memref<!tpu.dma_semaphore, #tpu.memory_space<semaphore_mem>>
    tpu.enqueue_dma source(%18 : memref<1x128xf32, #tpu.memory_space<any>>) target(%19 : memref<1x128xf32, #tpu.memory_space<vmem>>) target_semaphore(%21 : memref<!tpu.dma_semaphore, #tpu.memory_space<semaphore_mem>>)
    %c3_i32 = arith.constant 3 : i32
    %22 = arith.addi %0, %c3_i32 : i32
    %23 = arith.index_cast %22 : i32 to index
    %24 = memref.load %arg1[%23] : memref<16xi32, #tpu.memory_space<smem>>
    %c3_i32_12 = arith.constant 3 : i32
    %c0_i32_13 = arith.constant 0 : i32
    %25 = tpu.memref_slice %arg2[%24, %c0_i32_13] : memref<1024x128xf32, #tpu.memory_space<any>> -> memref<1x128xf32, #tpu.memory_space<any>>
    %c3_i32_14 = arith.constant 3 : i32
    %c0_i32_15 = arith.constant 0 : i32
    %26 = tpu.memref_slice %arg3[%c3_i32_14, %c0_i32_15] : memref<16x128xf32, #tpu.memory_space<vmem>> -> memref<1x128xf32, #tpu.memory_space<vmem>>
    %27 = tpu.memref_slice %arg4[%c3_i32_12] : memref<8x!tpu.dma_semaphore, #tpu.memory_space<semaphore_mem>> -> memref<1x!tpu.dma_semaphore, #tpu.memory_space<semaphore_mem>>
    %28 = tpu.memref_squeeze %27 : memref<1x!tpu.dma_semaphore, #tpu.memory_space<semaphore_mem>> -> memref<!tpu.dma_semaphore, #tpu.memory_space<semaphore_mem>>
    tpu.enqueue_dma source(%25 : memref<1x128xf32, #tpu.memory_space<any>>) target(%26 : memref<1x128xf32, #tpu.memory_space<vmem>>) target_semaphore(%28 : memref<!tpu.dma_semaphore, #tpu.memory_space<semaphore_mem>>)
    %c4_i32 = arith.constant 4 : i32
    %29 = arith.addi %0, %c4_i32 : i32
    %30 = arith.index_cast %29 : i32 to index
    %31 = memref.load %arg1[%30] : memref<16xi32, #tpu.memory_space<smem>>
    %c4_i32_16 = arith.constant 4 : i32
    %c0_i32_17 = arith.constant 0 : i32
    %32 = tpu.memref_slice %arg2[%31, %c0_i32_17] : memref<1024x128xf32, #tpu.memory_space<any>> -> memref<1x128xf32, #tpu.memory_space<any>>
    %c4_i32_18 = arith.constant 4 : i32
    %c0_i32_19 = arith.constant 0 : i32
    %33 = tpu.memref_slice %arg3[%c4_i32_18, %c0_i32_19] : memref<16x128xf32, #tpu.memory_space<vmem>> -> memref<1x128xf32, #tpu.memory_space<vmem>>
    %34 = tpu.memref_slice %arg4[%c4_i32_16] : memref<8x!tpu.dma_semaphore, #tpu.memory_space<semaphore_mem>> -> memref<1x!tpu.dma_semaphore, #tpu.memory_space<semaphore_mem>>
    %35 = tpu.memref_squeeze %34 : memref<1x!tpu.dma_semaphore, #tpu.memory_space<semaphore_mem>> -> memref<!tpu.dma_semaphore, #tpu.memory_space<semaphore_mem>>
    tpu.enqueue_dma source(%32 : memref<1x128xf32, #tpu.memory_space<any>>) target(%33 : memref<1x128xf32, #tpu.memory_space<vmem>>) target_semaphore(%35 : memref<!tpu.dma_semaphore, #tpu.memory_space<semaphore_mem>>)
    %c5_i32 = arith.constant 5 : i32
    %36 = arith.addi %0, %c5_i32 : i32
    %37 = arith.index_cast %36 : i32 to index
    %38 = memref.load %arg1[%37] : memref<16xi32, #tpu.memory_space<smem>>
    %c5_i32_20 = arith.constant 5 : i32
    %c0_i32_21 = arith.constant 0 : i32
    %39 = tpu.memref_slice %arg2[%38, %c0_i32_21] : memref<1024x128xf32, #tpu.memory_space<any>> -> memref<1x128xf32, #tpu.memory_space<any>>
    %c5_i32_22 = arith.constant 5 : i32
    %c0_i32_23 = arith.constant 0 : i32
    %40 = tpu.memref_slice %arg3[%c5_i32_22, %c0_i32_23] : memref<16x128xf32, #tpu.memory_space<vmem>> -> memref<1x128xf32, #tpu.memory_space<vmem>>
    %41 = tpu.memref_slice %arg4[%c5_i32_20] : memref<8x!tpu.dma_semaphore, #tpu.memory_space<semaphore_mem>> -> memref<1x!tpu.dma_semaphore, #tpu.memory_space<semaphore_mem>>
    %42 = tpu.memref_squeeze %41 : memref<1x!tpu.dma_semaphore, #tpu.memory_space<semaphore_mem>> -> memref<!tpu.dma_semaphore, #tpu.memory_space<semaphore_mem>>
    tpu.enqueue_dma source(%39 : memref<1x128xf32, #tpu.memory_space<any>>) target(%40 : memref<1x128xf32, #tpu.memory_space<vmem>>) target_semaphore(%42 : memref<!tpu.dma_semaphore, #tpu.memory_space<semaphore_mem>>)
    %c6_i32 = arith.constant 6 : i32
    %43 = arith.addi %0, %c6_i32 : i32
    %44 = arith.index_cast %43 : i32 to index
    %45 = memref.load %arg1[%44] : memref<16xi32, #tpu.memory_space<smem>>
    %c6_i32_24 = arith.constant 6 : i32
    %c0_i32_25 = arith.constant 0 : i32
    %46 = tpu.memref_slice %arg2[%45, %c0_i32_25] : memref<1024x128xf32, #tpu.memory_space<any>> -> memref<1x128xf32, #tpu.memory_space<any>>
    %c6_i32_26 = arith.constant 6 : i32
    %c0_i32_27 = arith.constant 0 : i32
    %47 = tpu.memref_slice %arg3[%c6_i32_26, %c0_i32_27] : memref<16x128xf32, #tpu.memory_space<vmem>> -> memref<1x128xf32, #tpu.memory_space<vmem>>
    %48 = tpu.memref_slice %arg4[%c6_i32_24] : memref<8x!tpu.dma_semaphore, #tpu.memory_space<semaphore_mem>> -> memref<1x!tpu.dma_semaphore, #tpu.memory_space<semaphore_mem>>
    %49 = tpu.memref_squeeze %48 : memref<1x!tpu.dma_semaphore, #tpu.memory_space<semaphore_mem>> -> memref<!tpu.dma_semaphore, #tpu.memory_space<semaphore_mem>>
    tpu.enqueue_dma source(%46 : memref<1x128xf32, #tpu.memory_space<any>>) target(%47 : memref<1x128xf32, #tpu.memory_space<vmem>>) target_semaphore(%49 : memref<!tpu.dma_semaphore, #tpu.memory_space<semaphore_mem>>)
    %c7_i32 = arith.constant 7 : i32
    %50 = arith.addi %0, %c7_i32 : i32
    %51 = arith.index_cast %50 : i32 to index
    %52 = memref.load %arg1[%51] : memref<16xi32, #tpu.memory_space<smem>>
    %c7_i32_28 = arith.constant 7 : i32
    %c0_i32_29 = arith.constant 0 : i32
    %53 = tpu.memref_slice %arg2[%52, %c0_i32_29] : memref<1024x128xf32, #tpu.memory_space<any>> -> memref<1x128xf32, #tpu.memory_space<any>>
    %c7_i32_30 = arith.constant 7 : i32
    %c0_i32_31 = arith.constant 0 : i32
    %54 = tpu.memref_slice %arg3[%c7_i32_30, %c0_i32_31] : memref<16x128xf32, #tpu.memory_space<vmem>> -> memref<1x128xf32, #tpu.memory_space<vmem>>
    %55 = tpu.memref_slice %arg4[%c7_i32_28] : memref<8x!tpu.dma_semaphore, #tpu.memory_space<semaphore_mem>> -> memref<1x!tpu.dma_semaphore, #tpu.memory_space<semaphore_mem>>
    %56 = tpu.memref_squeeze %55 : memref<1x!tpu.dma_semaphore, #tpu.memory_space<semaphore_mem>> -> memref<!tpu.dma_semaphore, #tpu.memory_space<semaphore_mem>>
    tpu.enqueue_dma source(%53 : memref<1x128xf32, #tpu.memory_space<any>>) target(%54 : memref<1x128xf32, #tpu.memory_space<vmem>>) target_semaphore(%56 : memref<!tpu.dma_semaphore, #tpu.memory_space<semaphore_mem>>)
    %c0_i32_32 = arith.constant 0 : i32
    %c16_i32_33 = arith.constant 16 : i32
    %57 = arith.addi %c0_i32_32, %c16_i32_33 : i32
    %c1_i32_34 = arith.constant 1 : i32
    scf.for %arg5 = %c0_i32_32 to %57 step %c1_i32_34  : i32 {
      %c8_i32 = arith.constant 8 : i32
      %c0_i32_36 = arith.constant 0 : i32
      %58 = arith.cmpi eq, %c8_i32, %c0_i32_36 : i32
      %c1_i32_37 = arith.constant 1 : i32
      %59 = arith.select %58, %c1_i32_37, %c8_i32 : i32
      %60 = arith.remsi %arg5, %59 : i32
      %c0_i32_38 = arith.constant 0 : i32
      %61 = arith.cmpi ne, %60, %c0_i32_38 : i32
      %c0_i32_39 = arith.constant 0 : i32
      %62 = arith.cmpi slt, %60, %c0_i32_39 : i32
      %c0_i32_40 = arith.constant 0 : i32
      %63 = arith.cmpi slt, %59, %c0_i32_40 : i32
      %64 = arith.xori %62, %63 : i1
      %65 = arith.andi %64, %61 : i1
      %66 = arith.addi %60, %59 : i32
      %67 = arith.select %65, %66, %60 : i32
      %c0_i32_41 = arith.constant 0 : i32
      %c0_i32_42 = arith.constant 0 : i32
      %68 = tpu.memref_slice %arg2[%c0_i32_41, %c0_i32_42] : memref<1024x128xf32, #tpu.memory_space<any>> -> memref<1x128xf32, #tpu.memory_space<any>>
      %c0_i32_43 = arith.constant 0 : i32
      %69 = tpu.memref_slice %arg3[%arg5, %c0_i32_43] : memref<16x128xf32, #tpu.memory_space<vmem>> -> memref<1x128xf32, #tpu.memory_space<vmem>>
      %70 = tpu.memref_slice %arg4[%67] : memref<8x!tpu.dma_semaphore, #tpu.memory_space<semaphore_mem>> -> memref<1x!tpu.dma_semaphore, #tpu.memory_space<semaphore_mem>>
      %71 = tpu.memref_squeeze %70 : memref<1x!tpu.dma_semaphore, #tpu.memory_space<semaphore_mem>> -> memref<!tpu.dma_semaphore, #tpu.memory_space<semaphore_mem>>
      tpu.wait_dma2 semaphore(%71 : memref<!tpu.dma_semaphore, #tpu.memory_space<semaphore_mem>>) src(%68 : memref<1x128xf32, #tpu.memory_space<any>>) dst(%69 : memref<1x128xf32, #tpu.memory_space<vmem>>)
      %c8_i32_44 = arith.constant 8 : i32
      %72 = arith.addi %arg5, %c8_i32_44 : i32
      %c16_i32_45 = arith.constant 16 : i32
      %73 = arith.cmpi slt, %72, %c16_i32_45 : i32
      %74 = arith.extui %73 : i1 to i32
      %c0_i32_46 = arith.constant 0 : i32
      %75 = arith.cmpi ne, %74, %c0_i32_46 : i32
      scf.if %75 {
        %76 = arith.addi %0, %72 : i32
        %77 = arith.index_cast %76 : i32 to index
        %78 = memref.load %arg1[%77] : memref<16xi32, #tpu.memory_space<smem>>
        %c0_i32_47 = arith.constant 0 : i32
        %79 = tpu.memref_slice %arg2[%78, %c0_i32_47] : memref<1024x128xf32, #tpu.memory_space<any>> -> memref<1x128xf32, #tpu.memory_space<any>>
        %c0_i32_48 = arith.constant 0 : i32
        %80 = tpu.memref_slice %arg3[%72, %c0_i32_48] : memref<16x128xf32, #tpu.memory_space<vmem>> -> memref<1x128xf32, #tpu.memory_space<vmem>>
        %81 = tpu.memref_slice %arg4[%67] : memref<8x!tpu.dma_semaphore, #tpu.memory_space<semaphore_mem>> -> memref<1x!tpu.dma_semaphore, #tpu.memory_space<semaphore_mem>>
        %82 = tpu.memref_squeeze %81 : memref<1x!tpu.dma_semaphore, #tpu.memory_space<semaphore_mem>> -> memref<!tpu.dma_semaphore, #tpu.memory_space<semaphore_mem>>
        tpu.enqueue_dma source(%79 : memref<1x128xf32, #tpu.memory_space<any>>) target(%80 : memref<1x128xf32, #tpu.memory_space<vmem>>) target_semaphore(%82 : memref<!tpu.dma_semaphore, #tpu.memory_space<semaphore_mem>>)
      } else {
      }
    }
    %c16_i32_35 = arith.constant 16 : i32
    return
  }
  func.func @transform_1(%arg0: i32, %arg1: memref<16xi32, #tpu.memory_space<smem>>) -> (i32, i32) {
    %c0_i32 = arith.constant 0 : i32
    %c0_i32_0 = arith.constant 0 : i32
    return %arg0, %c0_i32 : i32, i32
  }
}

</mosaic_0001>

<llo_original>
// kernel: tpu_custom_call.1
$region0: #{tpu_custom_call.1}
  #allocation0 [shape = 'u32[]', space=smem, size = 0x4, offset = 0x4, fixed_abs, tag = 'smem constant byte address 0x4 - core index']
  #allocation1 [shape = 'u32[144,128]{1,0:T(1,128)}', space=vmem, size = 0x12000, scoped, tag = 'internal scratch']
  #allocation2 [shape = 's32[8]{0}', space=sflag, size = 0x20, scoped, tag = 'scratch operand']
  #allocation3 [shape = 's32[1]{0}', space=sflag, size = 0x4, scoped, tag = 'scoped memory for tpu_custom_call.1']
  #allocation4 [shape = 'u8[512]{0}', space=smem, size = 0x200, scoped, tag = 'prefetched SMEM operand 0']
  #allocation7 [shape = 's32[]', space=sflag, size = 0x4, offset = 0, fixed_abs, tag = 'sflag constant byte address 0x0 - dummy sync flag']
  #allocation8 [shape = 's32[]', space=sflag, size = 0x4, offset = 0, fixed_abs, tag = 'sflag constant byte address 0x0 - dummy sync flag']
  #allocation9 [shape = 'u32[]', space=smem, size = 0x4, offset = 0x44, fixed_abs, tag = 'smem constant byte address 0x44 - assertion arg 0']
  #allocation10 [shape = 'u32[]', space=smem, size = 0x4, offset = 0x48, fixed_abs, tag = 'smem constant byte address 0x48 - assertion arg 1']
  #allocation11 [shape = 's32[]', space=sflag, size = 0x4, offset = 0, fixed_abs, tag = 'sflag constant byte address 0x0 - dummy sync flag']
  #allocation12 [shape = 's32[]', space=sflag, size = 0x4, offset = 0, fixed_abs, tag = 'sflag constant byte address 0x0 - dummy sync flag']
  #allocation13 [shape = 's32[]', space=sflag, size = 0x4, offset = 0, fixed_abs, tag = 'sflag constant byte address 0x0 - dummy sync flag']
  #allocation14 [shape = 's32[]', space=sflag, size = 0x4, offset = 0, fixed_abs, tag = 'sflag constant byte address 0x0 - dummy sync flag']
  #allocation15 [shape = 's32[]', space=sflag, size = 0x4, offset = 0, fixed_abs, tag = 'sflag constant byte address 0x0 - dummy sync flag']
  #allocation16 [shape = 's32[]', space=sflag, size = 0x4, offset = 0, fixed_abs, tag = 'sflag constant byte address 0x0 - dummy sync flag']
  #allocation17 [shape = 's32[]', space=sflag, size = 0x4, offset = 0, fixed_abs, tag = 'sflag constant byte address 0x0 - dummy sync flag']
  #allocation18 [shape = 's32[]', space=sflag, size = 0x4, offset = 0, fixed_abs, tag = 'sflag constant byte address 0x0 - dummy sync flag']
  #allocation19 [shape = 's32[]', space=sflag, size = 0x4, offset = 0, fixed_abs, tag = 'sflag constant byte address 0x0 - dummy sync flag']
  #allocation20 [shape = 's32[]', space=sflag, size = 0x4, offset = 0, fixed_abs, tag = 'sflag constant byte address 0x0 - dummy sync flag']
  #allocation21 [shape = 's32[]', space=sflag, size = 0x4, offset = 0, fixed_abs, tag = 'sflag constant byte address 0x0 - dummy sync flag']
  #allocation22 [shape = 's32[]', space=sflag, size = 0x4, offset = 0, fixed_abs, tag = 'sflag constant byte address 0x0 - dummy sync flag']
  #allocation23 [shape = 's32[]', space=sflag, size = 0x4, offset = 0, fixed_abs, tag = 'sflag constant byte address 0x0 - dummy sync flag']
  #allocation24 [shape = 's32[]', space=sflag, size = 0x4, offset = 0, fixed_abs, tag = 'sflag constant byte address 0x0 - dummy sync flag']
  #allocation25 [shape = 's32[]', space=sflag, size = 0x4, offset = 0, fixed_abs, tag = 'sflag constant byte address 0x0 - dummy sync flag']
  #allocation26 [shape = 's32[]', space=sflag, size = 0x4, offset = 0, fixed_abs, tag = 'sflag constant byte address 0x0 - dummy sync flag']
  %s0 = inlined_call_operand.hbm [shape: s32[16], index: 0, kind: input, shape index: {}]
  %s1 = inlined_call_operand.hbm [shape: f32[1024,128], index: 1, kind: input, shape index: {}]
  %s2 = inlined_call_operand.hbm [shape: f32[16,128], index: 2, kind: output, shape index: {}]
  %s3 = sld [smem:[#allocation0]]
  $region57: #{tpu_custom_call.1} parent=0
    _
  %s5 = ssub.s32 1, %s3
  %s6 = scalar_select 0, %s5, %s3
  %8 = dma.hbm_to_smem %s0, 16, [#allocation4], [#allocation3]
  %9 = dma.done [#allocation3], 16
  %10 = sfence
  $region1: #{tpu_custom_call.1} parent=0
    #allocation5 [shape = 'u8[8192]{0}', space=vmem, size = 0x2000, scoped, tag = 'output window, operand 0, single buffered']
    #allocation6 [shape = 's32[1]{0}', space=sflag, size = 0x4, scoped, tag = 'scoped memory for tpu_custom_call.1']
    %11 = vsyncpa [#allocation6], 0
    %s12 = smul.u32 0, 16
    %s13 = sld [smem:[#allocation4 + %s12]]
    %s14 = smul.addr %s13, 16
    %s15 = scalar_lea.hbm %s1, %s14
    // Predicated region
    $region2: #{tpu_custom_call.1} parent=1 // pred_check
      _
    $region3: #{tpu_custom_call.1} parent=1 // pred_check_branch
      %17 = sbr.rel target = $region5
    $region4: #{tpu_custom_call.1} parent=1 // pred_region
      %18 = sst [smem:[#allocation9]] [#allocation8]
      %19 = sst [smem:[#allocation10]] [#allocation7]
    $region5: #{tpu_custom_call.1} parent=1 // pred_fallthru
      _
    %21 = shalt.err (0)
    %s23 = sshll.u32 [#allocation5], 4
    %s24 = int_to_ptr.vmem [resolvable:$true] %s23
    %26 = dma.hbm_to_vmem [thread:$0]  %s15, 16, %s24, [#allocation2]
    %s27 = sadd.s32 %s12, 1
    %s28 = sld [smem:[#allocation4 + %s27]]
    %s29 = smul.addr %s28, 16
    %s30 = scalar_lea.hbm %s1, %s29
    %s31 = scalar_lea.vmem [#allocation5], 1
    %s32 = scalar_lea.sflag [#allocation2], 1
    // Predicated region
    $region6: #{tpu_custom_call.1} parent=1 // pred_check
      _
    $region7: #{tpu_custom_call.1} parent=1 // pred_check_branch
      %34 = sbr.rel target = $region9
    $region8: #{tpu_custom_call.1} parent=1 // pred_region
      %35 = sst [smem:[#allocation9]] [#allocation12]
      %36 = sst [smem:[#allocation10]] [#allocation11]
    $region9: #{tpu_custom_call.1} parent=1 // pred_fallthru
      _
    %38 = shalt.err (0)
    %s40 = sshll.u32 %s31, 4
    %s41 = int_to_ptr.vmem [resolvable:$true] %s40
    %43 = dma.hbm_to_vmem [thread:$0]  %s30, 16, %s41, %s32
    %s44 = sadd.s32 %s12, 2
    %s45 = sld [smem:[#allocation4 + %s44]]
    %s46 = smul.addr %s45, 16
    %s47 = scalar_lea.hbm %s1, %s46
    %s48 = scalar_lea.vmem [#allocation5], 2
    %s49 = scalar_lea.sflag [#allocation2], 2
    // Predicated region
    $region10: #{tpu_custom_call.1} parent=1 // pred_check
      _
    $region11: #{tpu_custom_call.1} parent=1 // pred_check_branch
      %51 = sbr.rel target = $region13
    $region12: #{tpu_custom_call.1} parent=1 // pred_region
      %52 = sst [smem:[#allocation9]] [#allocation14]
      %53 = sst [smem:[#allocation10]] [#allocation13]
    $region13: #{tpu_custom_call.1} parent=1 // pred_fallthru
      _
    %55 = shalt.err (0)
    %s57 = sshll.u32 %s48, 4
    %s58 = int_to_ptr.vmem [resolvable:$true] %s57
    %60 = dma.hbm_to_vmem [thread:$0]  %s47, 16, %s58, %s49
    %s61 = sadd.s32 %s12, 3
    %s62 = sld [smem:[#allocation4 + %s61]]
    %s63 = smul.addr %s62, 16
    %s64 = scalar_lea.hbm %s1, %s63
    %s65 = scalar_lea.vmem [#allocation5], 3
    %s66 = scalar_lea.sflag [#allocation2], 3
    // Predicated region
    $region14: #{tpu_custom_call.1} parent=1 // pred_check
      _
    $region15: #{tpu_custom_call.1} parent=1 // pred_check_branch
      %68 = sbr.rel target = $region17
    $region16: #{tpu_custom_call.1} parent=1 // pred_region
      %69 = sst [smem:[#allocation9]] [#allocation16]
      %70 = sst [smem:[#allocation10]] [#allocation15]
    $region17: #{tpu_custom_call.1} parent=1 // pred_fallthru
      _
    %72 = shalt.err (0)
    %s74 = sshll.u32 %s65, 4
    %s75 = int_to_ptr.vmem [resolvable:$true] %s74
    %77 = dma.hbm_to_vmem [thread:$0]  %s64, 16, %s75, %s66
    %s78 = sadd.s32 %s12, 4
    %s79 = sld [smem:[#allocation4 + %s78]]
    %s80 = smul.addr %s79, 16
    %s81 = scalar_lea.hbm %s1, %s80
    %s82 = scalar_lea.vmem [#allocation5], 4
    %s83 = scalar_lea.sflag [#allocation2], 4
    // Predicated region
    $region18: #{tpu_custom_call.1} parent=1 // pred_check
      _
    $region19: #{tpu_custom_call.1} parent=1 // pred_check_branch
      %85 = sbr.rel target = $region21
    $region20: #{tpu_custom_call.1} parent=1 // pred_region
      %86 = sst [smem:[#allocation9]] [#allocation18]
      %87 = sst [smem:[#allocation10]] [#allocation17]
    $region21: #{tpu_custom_call.1} parent=1 // pred_fallthru
      _
    %89 = shalt.err (0)
    %s91 = sshll.u32 %s82, 4
    %s92 = int_to_ptr.vmem [resolvable:$true] %s91
    %94 = dma.hbm_to_vmem [thread:$0]  %s81, 16, %s92, %s83
    %s95 = sadd.s32 %s12, 5
    %s96 = sld [smem:[#allocation4 + %s95]]
    %s97 = smul.addr %s96, 16
    %s98 = scalar_lea.hbm %s1, %s97
    %s99 = scalar_lea.vmem [#allocation5], 5
    %s100 = scalar_lea.sflag [#allocation2], 5
    // Predicated region
    $region22: #{tpu_custom_call.1} parent=1 // pred_check
      _
    $region23: #{tpu_custom_call.1} parent=1 // pred_check_branch
      %102 = sbr.rel target = $region25
    $region24: #{tpu_custom_call.1} parent=1 // pred_region
      %103 = sst [smem:[#allocation9]] [#allocation20]
      %104 = sst [smem:[#allocation10]] [#allocation19]
    $region25: #{tpu_custom_call.1} parent=1 // pred_fallthru
      _
    %106 = shalt.err (0)
    %s108 = sshll.u32 %s99, 4
    %s109 = int_to_ptr.vmem [resolvable:$true] %s108
    %111 = dma.hbm_to_vmem [thread:$0]  %s98, 16, %s109, %s100
    %s112 = sadd.s32 %s12, 6
    %s113 = sld [smem:[#allocation4 + %s112]]
    %s114 = smul.addr %s113, 16
    %s115 = scalar_lea.hbm %s1, %s114
    %s116 = scalar_lea.vmem [#allocation5], 6
    %s117 = scalar_lea.sflag [#allocation2], 6
    // Predicated region
    $region26: #{tpu_custom_call.1} parent=1 // pred_check
      _
    $region27: #{tpu_custom_call.1} parent=1 // pred_check_branch
      %119 = sbr.rel target = $region29
    $region28: #{tpu_custom_call.1} parent=1 // pred_region
      %120 = sst [smem:[#allocation9]] [#allocation22]
      %121 = sst [smem:[#allocation10]] [#allocation21]
    $region29: #{tpu_custom_call.1} parent=1 // pred_fallthru
      _
    %123 = shalt.err (0)
    %s125 = sshll.u32 %s116, 4
    %s126 = int_to_ptr.vmem [resolvable:$true] %s125
    %128 = dma.hbm_to_vmem [thread:$0]  %s115, 16, %s126, %s117
    %s129 = sadd.s32 %s12, 7
    %s130 = sld [smem:[#allocation4 + %s129]]
    %s131 = smul.addr %s130, 16
    %s132 = scalar_lea.hbm %s1, %s131
    %s133 = scalar_lea.vmem [#allocation5], 7
    %s134 = scalar_lea.sflag [#allocation2], 7
    // Predicated region
    $region30: #{tpu_custom_call.1} parent=1 // pred_check
      _
    $region31: #{tpu_custom_call.1} parent=1 // pred_check_branch
      %136 = sbr.rel target = $region33
    $region32: #{tpu_custom_call.1} parent=1 // pred_region
      %137 = sst [smem:[#allocation9]] [#allocation24]
      %138 = sst [smem:[#allocation10]] [#allocation23]
    $region33: #{tpu_custom_call.1} parent=1 // pred_fallthru
      _
    %140 = shalt.err (0)
    %s142 = sshll.u32 %s133, 4
    %s143 = int_to_ptr.vmem [resolvable:$true] %s142
    %145 = dma.hbm_to_vmem [thread:$0]  %s132, 16, %s143, %s134
    loop: start=0, step=1, limit=16
    $region34: #{tpu_custom_call.1} parent=1 // loop_pre_header
      _
    $region35: #{tpu_custom_call.1} parent=1 // loop_header
      %s147 = sphi 0, %s151
      %p148 = scmp.ge.s32.totalorder %s147, 16
    $region36: #{tpu_custom_call.1} parent=1 // loop_header_branch
      %150 = sbr.rel (%p148) target = $region40
    $region37: #{tpu_custom_call.1} parent=1 // loop_body
      %p152 = scmp.lt.s32.totalorder %s147, 0
      %s153 = ssub.s32 0, %s147
      %s154 = scalar_select %p152, %s153, %s147
      %s155 = sand.u32 %s154, 7
      %s156 = ssub.s32 0, %s155
      %s157 = scalar_select %p152, %s156, %s155
      %p158 = scmp.ne.s32.totalorder %s157, 0
      %p159 = scmp.lt.s32.totalorder %s157, 0
      %p160 = pnand %p159, %p158
      %p161 = pneg %p160
      %s162 = sadd.s32 %s157, 8
      %s163 = scalar_select %p161, %s162, %s157
      %s164 = scalar_lea.sflag [#allocation2], %s163
      %s165 = smul.u32 1, 1
      %s166 = sshll.u32 %s165, 4
      %167 = dma.done %s164, %s166
      %s168 = sadd.s32 %s147, 8
      %p169 = scmp.lt.s32.totalorder %s168, 16
      // Predicated region
      $region41: #{tpu_custom_call.1} parent=37 // pred_check
        %p170 = pneg %p169
      $region42: #{tpu_custom_call.1} parent=37 // pred_check_branch
        %172 = sbr.rel (%p170) target = $region44
      $region43: #{tpu_custom_call.1} parent=37 // pred_region
        %s173 = sadd.s32 %s12, %s168
        %s174 = sld [smem:[#allocation4 + %s173]]
        %s175 = smul.addr %s174, 16
        %s176 = scalar_lea.hbm %s1, %s175
        %s177 = scalar_lea.vmem [#allocation5], %s168
        // Predicated region
        $region45: #{tpu_custom_call.1} parent=43 // pred_check
          _
        $region46: #{tpu_custom_call.1} parent=43 // pred_check_branch
          %179 = sbr.rel target = $region48
        $region47: #{tpu_custom_call.1} parent=43 // pred_region
          %180 = sst [smem:[#allocation9]] [#allocation26]
          %181 = sst [smem:[#allocation10]] [#allocation25]
        $region48: #{tpu_custom_call.1} parent=43 // pred_fallthru
          _
        %183 = shalt.err (0)
        %s185 = sshll.u32 %s177, 4
        %s186 = int_to_ptr.vmem [resolvable:$true] %s185
        %188 = dma.hbm_to_vmem [thread:$0]  %s176, 16, %s186, %s164
      $region44: #{tpu_custom_call.1} parent=37 // pred_fallthru
        _
    $region38: #{tpu_custom_call.1} parent=1 // loop_footer
      %s151 = sadd.s32 1, %s147
    $region39: #{tpu_custom_call.1} parent=1 // loop_footer_branch
      %146 = sbr.rel target = $region35
    $region40: #{tpu_custom_call.1} parent=1 // loop_exit
      _
    // Predicated region
    $region49: #{tpu_custom_call.1} parent=1 // pred_check
      _
    $region50: #{tpu_custom_call.1} parent=1 // pred_check_branch
      %190 = sbr.rel (0) target = $region52
    $region51: #{tpu_custom_call.1} parent=1 // pred_region
      %s192 = ssub.s32 256, 256
      %193 = vsyncadd [#allocation6], %s192
      %s194 = sshll.u32 [#allocation5], 4
      %s195 = int_to_ptr.vmem [resolvable:$true] %s194
      %200 = dma.vmem_to_hbm [thread:$0]  %s195, 256, %s2, [#allocation6], 128, 128, 8
    $region52: #{tpu_custom_call.1} parent=1 // pred_fallthru
      _
    // Predicated region
    $region53: #{tpu_custom_call.1} parent=1 // pred_check
      _
    $region54: #{tpu_custom_call.1} parent=1 // pred_check_branch
      %202 = sbr.rel (0) target = $region56
    $region55: #{tpu_custom_call.1} parent=1 // pred_region
      %203 = dma.done [#allocation6], 256
    $region56: #{tpu_custom_call.1} parent=1 // pred_fallthru
      _
    %204 = vsyncpa [#allocation6], 1
  %205 = vsyncmov [#allocation2]
  %s206 = vpop.sfrf %205
  %p207 = scmp.eq.s32.totalorder %s206, 0
  %p208 = pneg %p207
  %210 = shalt.err (%p208)
  %s211 = scalar_lea.sflag [#allocation2], 1
  %212 = vsyncmov %s211
  %s213 = vpop.sfrf %212
  %p214 = scmp.eq.s32.totalorder %s213, 0
  %p215 = pneg %p214
  %217 = shalt.err (%p215)
  %s218 = scalar_lea.sflag [#allocation2], 2
  %219 = vsyncmov %s218
  %s220 = vpop.sfrf %219
  %p221 = scmp.eq.s32.totalorder %s220, 0
  %p222 = pneg %p221
  %224 = shalt.err (%p222)
  %s225 = scalar_lea.sflag [#allocation2], 3
  %226 = vsyncmov %s225
  %s227 = vpop.sfrf %226
  %p228 = scmp.eq.s32.totalorder %s227, 0
  %p229 = pneg %p228
  %231 = shalt.err (%p229)
  %s232 = scalar_lea.sflag [#allocation2], 4
  %233 = vsyncmov %s232
  %s234 = vpop.sfrf %233
  %p235 = scmp.eq.s32.totalorder %s234, 0
  %p236 = pneg %p235
  %238 = shalt.err (%p236)
  %s239 = scalar_lea.sflag [#allocation2], 5
  %240 = vsyncmov %s239
  %s241 = vpop.sfrf %240
  %p242 = scmp.eq.s32.totalorder %s241, 0
  %p243 = pneg %p242
  %245 = shalt.err (%p243)
  %s246 = scalar_lea.sflag [#allocation2], 6
  %247 = vsyncmov %s246
  %s248 = vpop.sfrf %247
  %p249 = scmp.eq.s32.totalorder %s248, 0
  %p250 = pneg %p249
  %252 = shalt.err (%p250)
  %s253 = scalar_lea.sflag [#allocation2], 7
  %254 = vsyncmov %s253
  %s255 = vpop.sfrf %254
  %p256 = scmp.eq.s32.totalorder %s255, 0
  %p257 = pneg %p256
  %259 = shalt.err (%p257)

</llo_original>
